<compile_context>
chip_gen: v5e
topology: v5e:2x2
jax: 0.10.0
libtpu: 0.0.40
codegen_flags: <defaults>
</compile_context>

<pallas_src>
import math

import jax
import jax.numpy as jnp
from jax import lax
from jax.experimental import pallas as pl
from jax.experimental.pallas import tpu as pltpu


def _disc_kernel(v_ref, hpl_ref, hmi_ref, b_ref, out_ref):
    """Per-(batch, node-tile) bilinear scoring.

    v_ref:   (1, 1, H)   v = c @ W^T  (precomputed in the wrapper, f32)
    hpl_ref: (1, TN, H)  positive node embeddings tile (streaming dtype)
    hmi_ref: (1, TN, H)  negative (corrupted) node embeddings tile
    b_ref:   (1, 1)      bilinear bias scalar (SMEM, f32)
    out_ref: (1, 2, TN)  [sc_1 tile ; sc_2 tile]  (f32)
    """
    v = v_ref[0]                                   # (1, H), f32
    h_dtype = hpl_ref.dtype
    if v.dtype != h_dtype:
        # bf16 streaming: cast the tiny v operand down so the M=1 matmul is a
        # single-pass native-dtype MXU push (f32 accumulate is kept below).
        v = v.astype(h_dtype)
    bias = b_ref[0, 0]
    # Contract the feature axis of the (TN, H) tiles against v's feature axis
    # (transposed-RHS MXU contraction: no materialized XLU transpose copy).
    dn = (((1,), (1,)), ((), ()))
    sc1 = lax.dot_general(v, hpl_ref[0], dimension_numbers=dn,
                          preferred_element_type=jnp.float32)   # (1, TN)
    sc2 = lax.dot_general(v, hmi_ref[0], dimension_numbers=dn,
                          preferred_element_type=jnp.float32)   # (1, TN)
    # Output bytes are tiny (2*TN*4B/step vs MBs of input); two sublane stores
    # are not a bottleneck for this DMA-bound kernel.
    out_ref[:, 0, :] = sc1 + bias
    out_ref[:, 1, :] = sc2 + bias


def _pick_node_tile(n, h, bytes_per_elem=4,
                    vmem_budget_bytes=24 * 1024 * 1024, max_tile=2048):
    """Largest TN dividing n (n is already 128-aligned), preferring multiples
    of 256, capped so 2 inputs x 2 pipeline buffers x TN x H stays within the
    VMEM budget (leaves headroom under the 32 MiB scoped limit on v7x)."""
    budget_rows = max(128, vmem_budget_bytes // (4 * h * bytes_per_elem))
    cap = min(n, max_tile, budget_rows)
    for align in (256, 128):
        if n % align == 0:
            best = align
            t = align
            while t <= cap:
                if n % t == 0:
                    best = t
                t += align
            return best
    # Unreachable when the wrapper pads n to a multiple of 128.
    return min(n, 128)


def discriminator_forward(c, h_pl, h_mi, weight, bias,
                          s_bias1=None, s_bias2=None,
                          compute_dtype=None):
    """JAX wrapper mirroring Discriminator.forward.

    c:      (B, H)        broadcast over the node dim (torch.unsqueeze(c, 1))
    h_pl:   (B, N, H)
    h_mi:   (B, N, H)
    weight: (1, H, H)     nn.Bilinear weight
    bias:   (1,)          nn.Bilinear bias
    compute_dtype: streaming dtype for h_pl/h_mi. None (default) keeps the
        incoming dtype (no extra HBM cast pass). Passing jnp.bfloat16 halves
        kernel HBM traffic but is only a net win if the cast fuses upstream;
        results then differ from f32 by normal bf16 rounding.
    returns logits: (B, 2N)
    """
    B, H = c.shape
    _, N, _ = h_pl.shape

    # Hoisted projection: v[b, i] = sum_j W[i, j] * c[b, j]   (f32, tiny)
    w = weight[0].astype(jnp.float32)
    v = jnp.dot(c.astype(jnp.float32), w.T, preferred_element_type=jnp.float32)
    v3 = v.reshape(B, 1, H)                       # block-rule-friendly layout

    if compute_dtype is not None:
        h_pl = h_pl.astype(compute_dtype)
        h_mi = h_mi.astype(compute_dtype)
    h_dtype = h_pl.dtype
    b2 = bias.reshape(1, 1).astype(jnp.float32)

    # Pad the node axis up to a multiple of 128 so every tile is lane-aligned
    # and the pipeline never degenerates to a single full-extent block.
    N_pad = max(128, ((N + 127) // 128) * 128)
    if N_pad != N:
        pad = ((0, 0), (0, N_pad - N), (0, 0))
        h_pl = jnp.pad(h_pl, pad)
        h_mi = jnp.pad(h_mi, pad)

    TN = _pick_node_tile(N_pad, H, bytes_per_elem=jnp.dtype(h_dtype).itemsize)
    grid = (B, N_pad // TN)
    # NOTE: if B were large (>= 8) a batch-tiled block would make the stores
    # sublane-dense; DGI-style usage has B in {1, 2}, so we keep 1 per step.

    out3 = pl.pallas_call(
        _disc_kernel,
        out_shape=jax.ShapeDtypeStruct((B, 2, N_pad), jnp.float32),
        grid_spec=pltpu.PrefetchScalarGridSpec(
            num_scalar_prefetch=0,
            grid=grid,
            in_specs=[
                pl.BlockSpec((1, 1, H), lambda b, t: (b, 0, 0)),      # v
                pl.BlockSpec((1, TN, H), lambda b, t: (b, t, 0)),     # h_pl tile
                pl.BlockSpec((1, TN, H), lambda b, t: (b, t, 0)),     # h_mi tile
                pl.BlockSpec(memory_space=pltpu.MemorySpace.SMEM),    # bias
            ],
            out_specs=pl.BlockSpec((1, 2, TN), lambda b, t: (b, 0, t)),
        ),
        compiler_params=pltpu.CompilerParams(
            dimension_semantics=("parallel", "parallel"),
            vmem_limit_bytes=32 * 1024 * 1024,
        ),
    )(v3, h_pl, h_mi, b2)

    sc1 = out3[:, 0, :N]
    sc2 = out3[:, 1, :N]
    if s_bias1 is None and s_bias2 is None:
        if N_pad == N:
            # (B, 2, N) -> (B, 2N) is a free, contiguous reshape: [sc_1 | sc_2].
            return out3.reshape(B, 2 * N)
        return jnp.concatenate([sc1, sc2], axis=1)

    if s_bias1 is not None:
        sc1 = sc1 + s_bias1
    if s_bias2 is not None:
        sc2 = sc2 + s_bias2
    return jnp.concatenate([sc1, sc2], axis=1)


def init_discriminator_params(key, n_h):
    """Deterministic init matching Discriminator.weights_init:
    xavier_uniform_ on the Bilinear weight (shape (1, n_h, n_h)), zero bias."""
    # torch fan computation for a (1, n_h, n_h) tensor:
    #   fan_in = n_h * n_h, fan_out = 1 * n_h
    fan_in = n_h * n_h
    fan_out = n_h
    bound = math.sqrt(6.0 / (fan_in + fan_out))
    weight = jax.random.uniform(
        key, (1, n_h, n_h), dtype=jnp.float32, minval=-bound, maxval=bound)
    bias = jnp.zeros((1,), dtype=jnp.float32)
    return weight, bias


def _reference_forward(c, h_pl, h_mi, weight, bias):
    """Plain-JAX reference (same math as torch.nn.Bilinear)."""
    w = weight[0]  # (H, H)
    sc1 = jnp.einsum('bni,ij,bj->bn', h_pl, w, c) + bias[0]
    sc2 = jnp.einsum('bni,ij,bj->bn', h_mi, w, c) + bias[0]
    return jnp.concatenate([sc1, sc2], axis=1)


if __name__ == "__main__":
    B, N, n_h = 2, 8, 32   # batch, nodes, hidden

    key = jax.random.PRNGKey(0)
    k_w, k_c, k_pl, k_mi = jax.random.split(key, 4)

    weight, bias = init_discriminator_params(k_w, n_h)
    c = jax.random.normal(k_c, (B, n_h), dtype=jnp.float32)
    h_pl = jax.random.normal(k_pl, (B, N, n_h), dtype=jnp.float32)
    h_mi = jax.random.normal(k_mi, (B, N, n_h), dtype=jnp.float32)

    logits = discriminator_forward(c, h_pl, h_mi, weight, bias)
    logits = jax.block_until_ready(logits)

    ref = _reference_forward(c, h_pl, h_mi, weight, bias)
    assert logits.shape == (B, 2 * N), logits.shape
    assert jnp.allclose(logits, ref, atol=1e-4, rtol=1e-4), (
        "mismatch vs reference")

    print("KERNEL_OK")
</pallas_src>

<mosaic_0001>
module attributes {stable_mosaic.version = 11 : i64} {
  func.func @_disc_kernel(%arg0: i32, %arg1: i32, %arg2: memref<1x1x32xf32, #tpu.memory_space<vmem>>, %arg3: memref<1x128x32xf32, #tpu.memory_space<vmem>>, %arg4: memref<1x128x32xf32, #tpu.memory_space<vmem>>, %arg5: memref<1x1xf32, #tpu.memory_space<smem>>, %arg6: memref<1x2x128xf32, #tpu.memory_space<vmem>>) attributes {dimension_semantics = [#tpu.dimension_semantics<parallel>, #tpu.dimension_semantics<parallel>], iteration_bounds = array<i64: 2, 1>, scalar_prefetch = 0 : i64, scratch_operands = 0 : i64, tpu.core_type = #tpu.core_type<tc>, window_params = [{transform_indices = @transform_0, window_bounds = array<i64: 1, 1, 32>}, {transform_indices = @transform_1, window_bounds = array<i64: 1, 128, 32>}, {transform_indices = @transform_2, window_bounds = array<i64: 1, 128, 32>}, {transform_indices = @transform_3, window_bounds = array<i64: 1, 1>}, {transform_indices = @transform_4, window_bounds = array<i64: 1, 2, 128>}]} {
    %c0 = arith.constant 0 : index
    %c0_0 = arith.constant 0 : index
    %c0_1 = arith.constant 0 : index
    %0 = vector.load %arg2[%c0, %c0_0, %c0_1] : memref<1x1x32xf32, #tpu.memory_space<vmem>>, vector<1x1x32xf32>
    %1 = vector.shape_cast %0 : vector<1x1x32xf32> to vector<1x32xf32>
    %c0_2 = arith.constant 0 : index
    %c0_3 = arith.constant 0 : index
    %2 = memref.load %arg5[%c0_2, %c0_3] : memref<1x1xf32, #tpu.memory_space<smem>>
    %c0_4 = arith.constant 0 : index
    %c0_5 = arith.constant 0 : index
    %c0_6 = arith.constant 0 : index
    %3 = vector.load %arg3[%c0_4, %c0_5, %c0_6] : memref<1x128x32xf32, #tpu.memory_space<vmem>>, vector<1x128x32xf32>
    %4 = vector.shape_cast %3 : vector<1x128x32xf32> to vector<128x32xf32>
    %cst = arith.constant dense<0.000000e+00> : vector<1x128xf32>
    %5 = tpu.matmul %1, %4, %cst {dimension_numbers = #tpu.dot_dimension_numbers<[1], [1], [0], [0], [0, 0, 1, 0], [], []>} : vector<1x32xf32>, vector<128x32xf32>, vector<1x128xf32> -> vector<1x128xf32>
    %c0_7 = arith.constant 0 : index
    %c0_8 = arith.constant 0 : index
    %c0_9 = arith.constant 0 : index
    %6 = vector.load %arg4[%c0_7, %c0_8, %c0_9] : memref<1x128x32xf32, #tpu.memory_space<vmem>>, vector<1x128x32xf32>
    %7 = vector.shape_cast %6 : vector<1x128x32xf32> to vector<128x32xf32>
    %cst_10 = arith.constant dense<0.000000e+00> : vector<1x128xf32>
    %8 = tpu.matmul %1, %7, %cst_10 {dimension_numbers = #tpu.dot_dimension_numbers<[1], [1], [0], [0], [0, 0, 1, 0], [], []>} : vector<1x32xf32>, vector<128x32xf32>, vector<1x128xf32> -> vector<1x128xf32>
    %9 = vector.broadcast %2 : f32 to vector<1x128xf32>
    %10 = arith.addf %5, %9 : vector<1x128xf32>
    %c0_11 = arith.constant 0 : index
    %c0_12 = arith.constant 0 : index
    %c0_13 = arith.constant 0 : index
    %11 = vector.load %arg6[%c0_11, %c0_12, %c0_13] : memref<1x2x128xf32, #tpu.memory_space<vmem>>, vector<1x1x128xf32>
    %12 = vector.shape_cast %11 : vector<1x1x128xf32> to vector<1x128xf32>
    %13 = vector.shape_cast %10 : vector<1x128xf32> to vector<1x1x128xf32>
    tpu.vector_store %arg6[%c0_11, %c0_12, %c0_13], %13 {strides = array<i32>} : memref<1x2x128xf32, #tpu.memory_space<vmem>>, vector<1x1x128xf32>,
    %14 = vector.broadcast %2 : f32 to vector<1x128xf32>
    %15 = arith.addf %8, %14 : vector<1x128xf32>
    %c0_14 = arith.constant 0 : index
    %c1 = arith.constant 1 : index
    %c0_15 = arith.constant 0 : index
    %16 = vector.load %arg6[%c0_14, %c1, %c0_15] : memref<1x2x128xf32, #tpu.memory_space<vmem>>, vector<1x1x128xf32>
    %17 = vector.shape_cast %16 : vector<1x1x128xf32> to vector<1x128xf32>
    %18 = vector.shape_cast %15 : vector<1x128xf32> to vector<1x1x128xf32>
    tpu.vector_store %arg6[%c0_14, %c1, %c0_15], %18 {strides = array<i32>} : memref<1x2x128xf32, #tpu.memory_space<vmem>>, vector<1x1x128xf32>,
    return
  }
  func.func @transform_0(%arg0: i32, %arg1: i32) -> (i32, i32, i32) {
    %c0_i32 = arith.constant 0 : i32
    %c0_i32_0 = arith.constant 0 : i32
    %c0_i32_1 = arith.constant 0 : i32
    return %arg0, %c0_i32, %c0_i32_0 : i32, i32, i32
  }
  func.func @transform_1(%arg0: i32, %arg1: i32) -> (i32, i32, i32) {
    %c0_i32 = arith.constant 0 : i32
    %c0_i32_0 = arith.constant 0 : i32
    return %arg0, %arg1, %c0_i32 : i32, i32, i32
  }
  func.func @transform_2(%arg0: i32, %arg1: i32) -> (i32, i32, i32) {
    %c0_i32 = arith.constant 0 : i32
    %c0_i32_0 = arith.constant 0 : i32
    return %arg0, %arg1, %c0_i32 : i32, i32, i32
  }
  func.func @transform_3(%arg0: i32, %arg1: i32) -> (i32, i32) {
    %c0_i32 = arith.constant 0 : i32
    %c0_i32_0 = arith.constant 0 : i32
    %c0_i32_1 = arith.constant 0 : i32
    return %c0_i32, %c0_i32_0 : i32, i32
  }
  func.func @transform_4(%arg0: i32, %arg1: i32) -> (i32, i32, i32) {
    %c0_i32 = arith.constant 0 : i32
    %c0_i32_0 = arith.constant 0 : i32
    return %arg0, %c0_i32, %arg1 : i32, i32, i32
  }
}

</mosaic_0001>

<llo_original>
// kernel: tpu_custom_call.1
$region0: #{tpu_custom_call.1}
  #allocation0 [shape = 'u32[]', space=smem, size = 0x4, offset = 0x4, fixed_abs, tag = 'smem constant byte address 0x4 - core index']
  #allocation1 [shape = 'u32[72,128]{1,0:T(1,128)}', space=vmem, size = 0x9000, scoped, tag = 'internal scratch']
  #allocation2 [shape = 'f32[1,1]{1,0:T(1,128)S(6)}', space=smem, size = 0x200, scoped, tag = 'scoped memory for tpu_custom_call.1']
  %s0 = inlined_call_operand.vmem [shape: f32[2,1,32], index: 0, kind: input, shape index: {}]
  %s1 = inlined_call_operand.vmem [shape: f32[2,128,32], index: 1, kind: input, shape index: {}]
  %s2 = inlined_call_operand.vmem [shape: f32[2,128,32], index: 2, kind: input, shape index: {}]
  %s3 = inlined_call_operand.<no memory space> [shape: f32[1,1], index: 3, kind: input, shape index: {}]
  %s4 = inlined_call_operand.hbm [shape: f32[2,2,128], index: 4, kind: output, shape index: {}]
  %s5 = sld [smem:[#allocation0]]
  $region49: #{tpu_custom_call.1} parent=0
    _
  %s7 = ssub.s32 1, %s5
  %s8 = scalar_select 0, %s7, %s5
  %9 = sst [smem:[#allocation2]] %s3
  $region1: #{tpu_custom_call.1} parent=0
    #allocation3 [shape = 'u8[2048]{0}', space=vmem, size = 0x800, scoped, tag = 'output window, operand 0']
    #allocation4 [shape = 's32[2]{0}', space=sflag, size = 0x8, scoped, tag = 'scoped memory for tpu_custom_call.1']
    %10 = vsyncpa [#allocation4], 0
    %s11 = scalar_lea.sflag [#allocation4], 1
    %12 = vsyncpa %s11, 0
    loop: start=0, step=1, limit=4
    $region2: #{tpu_custom_call.1} parent=1 // loop_pre_header
      _
    $region3: #{tpu_custom_call.1} parent=1 // loop_header
      %s14 = sphi 0, %s18
      %p15 = scmp.ge.s32.totalorder %s14, 4
      %s21 = sphi 0, %s33
      %s22 = sphi 0, %s29
      %s23 = sphi 0, %s21
      %s24 = sphi 0, %s22
      %s25 = sphi 0, %s23
      %s26 = sphi 0, %s24
      %s36 = sphi 0, %s38
      %s39 = sphi 0, %s36
      %s40 = sphi 0, %s39
      %s56 = sphi 0, %s40
      %s64 = sphi 0, %s66
      %s67 = sphi 0, %s64
      %s68 = sphi 0, %s67
      %s84 = sphi 0, %s68
      %s92 = sphi 0, %s94
      %s95 = sphi 0, %s92
      %s96 = sphi 0, %s95
      %s112 = sphi 0, %s96
      %s116 = sphi 0, %s116
      %s118 = sphi 0, %s116
      %s119 = sphi 0, %s118
      %s133 = sphi 0, %s119
      %s141 = sphi 0, %s143
      %s144 = sphi 0, %s141
      %s145 = sphi 0, %s144
      %s161 = sphi 0, %s145
    $region4: #{tpu_custom_call.1} parent=1 // loop_header_branch
      %17 = sbr.rel (%p15) target = $region8
    $region5: #{tpu_custom_call.1} parent=1 // loop_body
      %s19 = ssub.s32 %s14, 1
      %s20 = ssub.s32 %s14, 2
      %s27 = sadd.s32 1, %s22
      %p28 = scmp.ge.s32.totalorder %s27, 1
      %s29 = scalar_select %p28, 0, %s27
      %s30 = sadd.s32 1, %s21
      %s31 = scalar_select %p28, %s30, %s21
      %p32 = scmp.ge.s32.totalorder %s31, 2
      %s33 = scalar_select %p32, 0, %s31
      %s34 = ssub.s32 %s21, %s33
      %p35 = scmp.eq.s32.totalorder %s34, 0
      %s37 = sadd.s32 %s36, 1
      %s38 = scalar_select %p35, %s36, %s37
      %p41 = pneg %p35
      %p42 = scmp.eq.s32.totalorder %s14, 1
      %p43 = por %p41, %p42
      %p44 = scmp.ne.s32.totalorder %s36, %s39
      %p45 = scmp.eq.s32.totalorder %s14, 0
      %p46 = por %p44, %p45
      %p47 = scmp.ne.s32.totalorder %s36, %s39
      %p48 = scmp.eq.s32.totalorder %s19, 1
      %p49 = por %p47, %p48
      %p50 = scmp.ne.s32.totalorder %s39, %s40
      %p51 = scmp.eq.s32.totalorder %s19, 0
      %p52 = por %p50, %p51
      %p53 = scmp.ne.s32.totalorder %s39, %s40
      %p54 = scmp.eq.s32.totalorder %s20, 1
      %p55 = por %p53, %p54
      %p57 = scmp.ne.s32.totalorder %s40, %s56
      %p58 = scmp.eq.s32.totalorder %s20, 0
      %p59 = por %p57, %p58
      %s60 = ssub.s32 %s21, %s33
      %s61 = ssub.s32 %s22, %s29
      %s62 = sor.u32 %s60, %s61
      %p63 = scmp.eq.s32.totalorder %s62, 0
      %s65 = sadd.s32 %s64, 1
      %s66 = scalar_select %p63, %s64, %s65
      %p69 = pneg %p63
      %p70 = scmp.eq.s32.totalorder %s14, 1
      %p71 = por %p69, %p70
      %p72 = scmp.ne.s32.totalorder %s64, %s67
      %p73 = scmp.eq.s32.totalorder %s14, 0
      %p74 = por %p72, %p73
      %p75 = scmp.ne.s32.totalorder %s64, %s67
      %p76 = scmp.eq.s32.totalorder %s19, 1
      %p77 = por %p75, %p76
      %p78 = scmp.ne.s32.totalorder %s67, %s68
      %p79 = scmp.eq.s32.totalorder %s19, 0
      %p80 = por %p78, %p79
      %p81 = scmp.ne.s32.totalorder %s67, %s68
      %p82 = scmp.eq.s32.totalorder %s20, 1
      %p83 = por %p81, %p82
      %p85 = scmp.ne.s32.totalorder %s68, %s84
      %p86 = scmp.eq.s32.totalorder %s20, 0
      %p87 = por %p85, %p86
      %s88 = ssub.s32 %s21, %s33
      %s89 = ssub.s32 %s22, %s29
      %s90 = sor.u32 %s88, %s89
      %p91 = scmp.eq.s32.totalorder %s90, 0
      %s93 = sadd.s32 %s92, 1
      %s94 = scalar_select %p91, %s92, %s93
      %p97 = pneg %p91
      %p98 = scmp.eq.s32.totalorder %s14, 1
      %p99 = por %p97, %p98
      %p100 = scmp.ne.s32.totalorder %s92, %s95
      %p101 = scmp.eq.s32.totalorder %s14, 0
      %p102 = por %p100, %p101
      %p103 = scmp.ne.s32.totalorder %s92, %s95
      %p104 = scmp.eq.s32.totalorder %s19, 1
      %p105 = por %p103, %p104
      %p106 = scmp.ne.s32.totalorder %s95, %s96
      %p107 = scmp.eq.s32.totalorder %s19, 0
      %p108 = por %p106, %p107
      %p109 = scmp.ne.s32.totalorder %s95, %s96
      %p110 = scmp.eq.s32.totalorder %s20, 1
      %p111 = por %p109, %p110
      %p113 = scmp.ne.s32.totalorder %s96, %s112
      %p114 = scmp.eq.s32.totalorder %s20, 0
      %p115 = por %p113, %p114
      %s117 = sadd.s32 %s116, 1
      %p120 = scmp.eq.s32.totalorder %s14, 1
      %p121 = scmp.ne.s32.totalorder %s116, %s118
      %p122 = scmp.eq.s32.totalorder %s14, 0
      %p123 = por %p121, %p122
      %p124 = scmp.ne.s32.totalorder %s116, %s118
      %p125 = scmp.eq.s32.totalorder %s19, 1
      %p126 = por %p124, %p125
      %p127 = scmp.ne.s32.totalorder %s118, %s119
      %p128 = scmp.eq.s32.totalorder %s19, 0
      %p129 = por %p127, %p128
      %p130 = scmp.ne.s32.totalorder %s118, %s119
      %p131 = scmp.eq.s32.totalorder %s20, 1
      %p132 = por %p130, %p131
      %p134 = scmp.ne.s32.totalorder %s119, %s133
      %p135 = scmp.eq.s32.totalorder %s20, 0
      %p136 = por %p134, %p135
      %s137 = ssub.s32 %s21, %s33
      %s138 = ssub.s32 %s22, %s29
      %s139 = sor.u32 %s137, %s138
      %p140 = scmp.eq.s32.totalorder %s139, 0
      %s142 = sadd.s32 %s141, 1
      %s143 = scalar_select %p140, %s141, %s142
      %p146 = pneg %p140
      %p147 = scmp.eq.s32.totalorder %s14, 1
      %p148 = por %p146, %p147
      %p149 = scmp.ne.s32.totalorder %s141, %s144
      %p150 = scmp.eq.s32.totalorder %s14, 0
      %p151 = por %p149, %p150
      %p152 = scmp.ne.s32.totalorder %s141, %s144
      %p153 = scmp.eq.s32.totalorder %s19, 1
      %p154 = por %p152, %p153
      %p155 = scmp.ne.s32.totalorder %s144, %s145
      %p156 = scmp.eq.s32.totalorder %s19, 0
      %p157 = por %p155, %p156
      %p158 = scmp.ne.s32.totalorder %s144, %s145
      %p159 = scmp.eq.s32.totalorder %s20, 1
      %p160 = por %p158, %p159
      %p162 = scmp.ne.s32.totalorder %s145, %s161
      %p163 = scmp.eq.s32.totalorder %s20, 0
      %p164 = por %p162, %p163
      %p165 = scmp.le.s32.totalorder 1, %s14
      %p166 = scmp.lt.s32.totalorder %s14, 3
      %p167 = pnand %p165, %p166
      %p168 = pneg %p167
      // Predicated region
      $region9: #{tpu_custom_call.1} parent=5 // pred_check
        _
      $region10: #{tpu_custom_call.1} parent=5 // pred_check_branch
        %170 = sbr.rel (%p167) target = $region12
      $region11: #{tpu_custom_call.1} parent=5 // pred_region
        %s171 = ssub.s32 %s14, 1
        // Predicated region
        $region13: #{tpu_custom_call.1} parent=11 // pred_check
          %p172 = pneg %p129
        $region14: #{tpu_custom_call.1} parent=11 // pred_check_branch
          %174 = sbr.rel (%p172) target = $region16
        $region15: #{tpu_custom_call.1} parent=11 // pred_region
          _
        $region16: #{tpu_custom_call.1} parent=11 // pred_fallthru
          _
      $region12: #{tpu_custom_call.1} parent=5 // pred_fallthru
        _
      %p175 = scmp.lt.s32.totalorder %s14, 2
      // Predicated region
      $region17: #{tpu_custom_call.1} parent=5 // pred_check
        %p176 = pneg %p175
      $region18: #{tpu_custom_call.1} parent=5 // pred_check_branch
        %178 = sbr.rel (%p176) target = $region20
      $region19: #{tpu_custom_call.1} parent=5 // pred_region
        // Predicated region
        $region21: #{tpu_custom_call.1} parent=19 // pred_check
          %p179 = pneg %p46
        $region22: #{tpu_custom_call.1} parent=19 // pred_check_branch
          %181 = sbr.rel (%p179) target = $region24
        $region23: #{tpu_custom_call.1} parent=19 // pred_region
          %p182 = scmp.lt.s32.totalorder %s21, 1
          %s183 = scalar_select %p182, %s21, 1
          %s184 = scalar_lea.vmem %s0, %s183
        $region24: #{tpu_custom_call.1} parent=19 // pred_fallthru
          _
        // Predicated region
        $region25: #{tpu_custom_call.1} parent=19 // pred_check
          %p185 = pneg %p74
        $region26: #{tpu_custom_call.1} parent=19 // pred_check_branch
          %187 = sbr.rel (%p185) target = $region28
        $region27: #{tpu_custom_call.1} parent=19 // pred_region
          %s188 = smul.u32 16, %s22
          %p189 = scmp.lt.s32.totalorder %s21, 1
          %s190 = scalar_select %p189, %s21, 1
          %p191 = scmp.lt.s32.totalorder %s188, 15
          %s192 = scalar_select %p191, %s188, 15
          %s193 = smul.addr %s190, 16
          %s194 = sadd.s32 %s192, %s193
          %s195 = smul.addr %s194, 8
          %s196 = scalar_lea.vmem %s1, %s195
          %s197 = smul.u32 16, %s22
        $region28: #{tpu_custom_call.1} parent=19 // pred_fallthru
          _
        // Predicated region
        $region29: #{tpu_custom_call.1} parent=19 // pred_check
          %p198 = pneg %p102
        $region30: #{tpu_custom_call.1} parent=19 // pred_check_branch
          %200 = sbr.rel (%p198) target = $region32
        $region31: #{tpu_custom_call.1} parent=19 // pred_region
          %s201 = smul.u32 16, %s22
          %p202 = scmp.lt.s32.totalorder %s21, 1
          %s203 = scalar_select %p202, %s21, 1
          %p204 = scmp.lt.s32.totalorder %s201, 15
          %s205 = scalar_select %p204, %s201, 15
          %s206 = smul.addr %s203, 16
          %s207 = sadd.s32 %s205, %s206
          %s208 = smul.addr %s207, 8
          %s209 = scalar_lea.vmem %s2, %s208
          %s210 = smul.u32 16, %s22
        $region32: #{tpu_custom_call.1} parent=19 // pred_fallthru
          _
      $region20: #{tpu_custom_call.1} parent=5 // pred_fallthru
        _
      %p211 = scmp.le.s32.totalorder 1, %s14
      %p212 = scmp.lt.s32.totalorder %s14, 3
      %p213 = pnand %p211, %p212
      %p214 = pneg %p213
      // Predicated region
      $region33: #{tpu_custom_call.1} parent=5 // pred_check
        _
      $region34: #{tpu_custom_call.1} parent=5 // pred_check_branch
        %216 = sbr.rel (%p213) target = $region36
      $region35: #{tpu_custom_call.1} parent=5 // pred_region
        %s217 = ssub.s32 %s14, 1
        %p218 = scmp.lt.s32.totalorder %s23, 1
        %s219 = scalar_select %p218, %s23, 1
        %s220 = scalar_lea.vmem %s0, %s219
        %p221 = pneg %p52
        %p222 = pneg %p49
        %s223 = smul.u32 16, %s24
        %p224 = scmp.lt.s32.totalorder %s23, 1
        %s225 = scalar_select %p224, %s23, 1
        %p226 = scmp.lt.s32.totalorder %s223, 15
        %s227 = scalar_select %p226, %s223, 15
        %s228 = smul.addr %s225, 16
        %s229 = sadd.s32 %s227, %s228
        %s230 = smul.addr %s229, 8
        %s231 = scalar_lea.vmem %s1, %s230
        %p232 = pneg %p80
        %p233 = pneg %p77
        %s234 = smul.u32 16, %s24
        %p235 = scmp.lt.s32.totalorder %s23, 1
        %s236 = scalar_select %p235, %s23, 1
        %p237 = scmp.lt.s32.totalorder %s234, 15
        %s238 = scalar_select %p237, %s234, 15
        %s239 = smul.addr %s236, 16
        %s240 = sadd.s32 %s238, %s239
        %s241 = smul.addr %s240, 8
        %s242 = scalar_lea.vmem %s2, %s241
        %p243 = pneg %p108
        %p244 = pneg %p105
        %p245 = pneg %p129
        %p246 = pneg %p126
        %p247 = pneg %p157
        %p248 = pneg %p154
        %s249 = sand.u32 %s144, 1
        %s250 = scalar_lea.sflag [#allocation4], %s249
        %s251 = sand.u32 %s144, 1
        %s252 = smul.addr %s251, 2
        %s253 = scalar_lea.vmem [#allocation3], %s252
        %p254 = scmp.lt.s32.totalorder %s23, 1
        %s255 = scalar_select %p254, %s23, 1
        %s256 = scalar_lea.vmem %s0, %s255
        %s257 = smul.u32 16, %s24
        %p258 = scmp.lt.s32.totalorder %s23, 1
        %s259 = scalar_select %p258, %s23, 1
        %p260 = scmp.lt.s32.totalorder %s257, 15
        %s261 = scalar_select %p260, %s257, 15
        %s262 = smul.addr %s259, 16
        %s263 = sadd.s32 %s261, %s262
        %s264 = smul.addr %s263, 8
        %s265 = scalar_lea.vmem %s1, %s264
        %s266 = smul.u32 16, %s24
        %s267 = smul.u32 16, %s24
        %p268 = scmp.lt.s32.totalorder %s23, 1
        %s269 = scalar_select %p268, %s23, 1
        %p270 = scmp.lt.s32.totalorder %s267, 15
        %s271 = scalar_select %p270, %s267, 15
        %s272 = smul.addr %s269, 16
        %s273 = sadd.s32 %s271, %s272
        %s274 = smul.addr %s273, 8
        %s275 = scalar_lea.vmem %s2, %s274
        %s276 = smul.u32 16, %s24
        %v277 = vld [vmem:[%s256] sm:$0x1]
        %s278 = sld [smem:[#allocation2]]
        %v279 = vld [vmem:[%s265] sm:$0xff]
        %v280 = vld [vmem:[%s265 + $0x8] sm:$0xff]
        %v281 = vld [vmem:[%s265 + $0x10] sm:$0xff]
        %v282 = vld [vmem:[%s265 + $0x18] sm:$0xff]
        %v283 = vld [vmem:[%s265 + $0x20] sm:$0xff]
        %v284 = vld [vmem:[%s265 + $0x28] sm:$0xff]
        %v285 = vld [vmem:[%s265 + $0x30] sm:$0xff]
        %v286 = vld [vmem:[%s265 + $0x38] sm:$0xff]
        %v287 = vld [vmem:[%s265 + $0x40] sm:$0xff]
        %v288 = vld [vmem:[%s265 + $0x48] sm:$0xff]
        %v289 = vld [vmem:[%s265 + $0x50] sm:$0xff]
        %v290 = vld [vmem:[%s265 + $0x58] sm:$0xff]
        %v291 = vld [vmem:[%s265 + $0x60] sm:$0xff]
        %v292 = vld [vmem:[%s265 + $0x68] sm:$0xff]
        %v293 = vld [vmem:[%s265 + $0x70] sm:$0xff]
        %v294 = vld [vmem:[%s265 + $0x78] sm:$0xff]
        %v295 = vld [vmem:[%s275] sm:$0xff]
        %v296 = vld [vmem:[%s275 + $0x8] sm:$0xff]
        %v297 = vld [vmem:[%s275 + $0x10] sm:$0xff]
        %v298 = vld [vmem:[%s275 + $0x18] sm:$0xff]
        %v299 = vld [vmem:[%s275 + $0x20] sm:$0xff]
        %v300 = vld [vmem:[%s275 + $0x28] sm:$0xff]
        %v301 = vld [vmem:[%s275 + $0x30] sm:$0xff]
        %v302 = vld [vmem:[%s275 + $0x38] sm:$0xff]
        %v303 = vld [vmem:[%s275 + $0x40] sm:$0xff]
        %v304 = vld [vmem:[%s275 + $0x48] sm:$0xff]
        %v305 = vld [vmem:[%s275 + $0x50] sm:$0xff]
        %v306 = vld [vmem:[%s275 + $0x58] sm:$0xff]
        %v307 = vld [vmem:[%s275 + $0x60] sm:$0xff]
        %v308 = vld [vmem:[%s275 + $0x68] sm:$0xff]
        %v309 = vld [vmem:[%s275 + $0x70] sm:$0xff]
        %v310 = vld [vmem:[%s275 + $0x78] sm:$0xff]
        %v311 = vstv %s278
        %vm312 = vcmask 261120
        %v314 = vsel %vm312, %v277, 0
        %v317 = vsel %vm312, %v279, 0
        %v320 = vsel %vm312, %v280, 0
        %v323 = vsel %vm312, %v281, 0
        %v326 = vsel %vm312, %v282, 0
        %v329 = vsel %vm312, %v283, 0
        %v332 = vsel %vm312, %v284, 0
        %v335 = vsel %vm312, %v285, 0
        %v338 = vsel %vm312, %v286, 0
        %v341 = vsel %vm312, %v287, 0
        %v344 = vsel %vm312, %v288, 0
        %v347 = vsel %vm312, %v289, 0
        %v350 = vsel %vm312, %v290, 0
        %v353 = vsel %vm312, %v291, 0
        %v356 = vsel %vm312, %v292, 0
        %v359 = vsel %vm312, %v293, 0
        %v362 = vsel %vm312, %v294, 0
        %364 = vmatpush.xpose.msra.mxu0 %v362
        %365 = vmatpush.xpose.msra.mxu0 %v359
        %366 = vmatpush.xpose.msra.mxu0 %v356
        %367 = vmatpush.xpose.msra.mxu0 %v353
        %368 = vmatpush.xpose.msra.mxu0 %v350
        %369 = vmatpush.xpose.msra.mxu0 %v347
        %370 = vmatpush.xpose.msra.mxu0 %v344
        %371 = vmatpush.xpose.msra.mxu0 %v341
        %372 = vmatpush.xpose.msra.mxu0 %v338
        %373 = vmatpush.xpose.msra.mxu0 %v335
        %374 = vmatpush.xpose.msra.mxu0 %v332
        %375 = vmatpush.xpose.msra.mxu0 %v329
        %376 = vmatpush.xpose.msra.mxu0 %v326
        %377 = vmatpush.xpose.msra.mxu0 %v323
        %378 = vmatpush.xpose.msra.mxu0 %v320
        %379 = vmatpush.xpose.msra.mxu0 %v317
        %380 = vmatmul.f32.gmra.mxu0 %v314
        %v381 = vpop.f32.mrf.mxu0
        %v382 = vadd.f32 %v311, %v381
        %383 = vdwg.mxu0
        %384 = vst [vmem:[%s253] sm:$0x1] %v382
        %v386 = vsel %vm312, %v295, 0
        %v389 = vsel %vm312, %v296, 0
        %v392 = vsel %vm312, %v297, 0
        %v395 = vsel %vm312, %v298, 0
        %v398 = vsel %vm312, %v299, 0
        %v401 = vsel %vm312, %v300, 0
        %v404 = vsel %vm312, %v301, 0
        %v407 = vsel %vm312, %v302, 0
        %v410 = vsel %vm312, %v303, 0
        %v413 = vsel %vm312, %v304, 0
        %v416 = vsel %vm312, %v305, 0
        %v419 = vsel %vm312, %v306, 0
        %v422 = vsel %vm312, %v307, 0
        %v425 = vsel %vm312, %v308, 0
        %v428 = vsel %vm312, %v309, 0
        %v431 = vsel %vm312, %v310, 0
        %433 = vmatpush.xpose.msra.mxu0 %v431
        %434 = vmatpush.xpose.msra.mxu0 %v428
        %435 = vmatpush.xpose.msra.mxu0 %v425
        %436 = vmatpush.xpose.msra.mxu0 %v422
        %437 = vmatpush.xpose.msra.mxu0 %v419
        %438 = vmatpush.xpose.msra.mxu0 %v416
        %439 = vmatpush.xpose.msra.mxu0 %v413
        %440 = vmatpush.xpose.msra.mxu0 %v410
        %441 = vmatpush.xpose.msra.mxu0 %v407
        %442 = vmatpush.xpose.msra.mxu0 %v404
        %443 = vmatpush.xpose.msra.mxu0 %v401
        %444 = vmatpush.xpose.msra.mxu0 %v398
        %445 = vmatpush.xpose.msra.mxu0 %v395
        %446 = vmatpush.xpose.msra.mxu0 %v392
        %447 = vmatpush.xpose.msra.mxu0 %v389
        %448 = vmatpush.xpose.msra.mxu0 %v386
        %449 = vmatmul.f32.gmra.mxu0 %v314
        %v450 = vpop.f32.mrf.mxu0
        %v451 = vadd.f32 %v311, %v450
        %452 = vdwg.mxu0
        %453 = vst [vmem:[%s253 + $0x1] sm:$0x1] %v451
        %s454 = sand.u32 %s144, 1
        %s455 = scalar_lea.sflag [#allocation4], %s454
        %s456 = sand.u32 %s144, 1
        %s457 = smul.addr %s456, 2
        %s458 = scalar_lea.vmem [#allocation3], %s457
        // Predicated region
        $region37: #{tpu_custom_call.1} parent=35 // pred_check
          %p459 = pneg %p154
        $region38: #{tpu_custom_call.1} parent=35 // pred_check_branch
          %461 = sbr.rel (%p459) target = $region40
        $region39: #{tpu_custom_call.1} parent=35 // pred_region
          %463 = vsyncadd %s455, 0
          %s464 = sadd.s32 %s24, %s23
          %s465 = smul.addr %s464, 2
          %s466 = scalar_lea.hbm %s4, %s465
          %s468 = sshll.u32 %s458, 4
          %s469 = int_to_ptr.vmem [resolvable:$true] %s468
          %s470 = sshll.u32 %s466, 4
          %s471 = int_to_ptr.hbm [resolvable:$true] %s470
          %473 = dma.vmem_to_hbm [thread:$0]  %s469, 32, %s471, %s455
        $region40: #{tpu_custom_call.1} parent=35 // pred_fallthru
          _
      $region36: #{tpu_custom_call.1} parent=5 // pred_fallthru
        _
      %p474 = scmp.le.s32.totalorder 2, %s14
      // Predicated region
      $region41: #{tpu_custom_call.1} parent=5 // pred_check
        %p475 = pneg %p474
      $region42: #{tpu_custom_call.1} parent=5 // pred_check_branch
        %477 = sbr.rel (%p475) target = $region44
      $region43: #{tpu_custom_call.1} parent=5 // pred_region
        %s478 = ssub.s32 %s14, 2
        // Predicated region
        $region45: #{tpu_custom_call.1} parent=43 // pred_check
          %p479 = pneg %p160
        $region46: #{tpu_custom_call.1} parent=43 // pred_check_branch
          %481 = sbr.rel (%p479) target = $region48
        $region47: #{tpu_custom_call.1} parent=43 // pred_region
          %s482 = sand.u32 %s145, 1
          %s483 = scalar_lea.sflag [#allocation4], %s482
          %s484 = sand.u32 %s145, 1
          %s485 = smul.addr %s484, 2
          %s486 = scalar_lea.vmem [#allocation3], %s485
          %488 = dma.done %s483, 32
        $region48: #{tpu_custom_call.1} parent=43 // pred_fallthru
          _
      $region44: #{tpu_custom_call.1} parent=5 // pred_fallthru
        _
    $region6: #{tpu_custom_call.1} parent=1 // loop_footer
      %s18 = sadd.s32 1, %s14
    $region7: #{tpu_custom_call.1} parent=1 // loop_footer_branch
      %13 = sbr.rel target = $region3
    $region8: #{tpu_custom_call.1} parent=1 // loop_exit
      _
    %489 = vsyncpa [#allocation4], 1
    %s490 = scalar_lea.sflag [#allocation4], 1
    %491 = vsyncpa %s490, 1

</llo_original>
